<compile_context>
chip_gen: v6e
topology: v6e:2x2x1
jax: 0.10.0
libtpu: 0.0.40
codegen_flags: <defaults>
</compile_context>

<pallas_src>
import functools

import jax
import jax.numpy as jnp
from jax.experimental import pallas as pl
from jax.experimental.pallas import tpu as pltpu


# ----------------------------------------------------------------------------
# Small helpers
# ----------------------------------------------------------------------------
def _round_up(x, m):
    return ((x + m - 1) // m) * m


def _cdiv(a, b):
    return -(-a // b)


@functools.lru_cache(maxsize=1)
def _gen_config():
    """(tm_cap, tn_cap, tk_cap, vmem_limit_bytes, two_tensorcores)."""
    MiB = 1024 * 1024
    try:
        kind = jax.devices()[0].device_kind.lower()
    except Exception:  # pragma: no cover - defensive
        kind = ""
    if "v5" in kind and ("lite" in kind or "5e" in kind):
        # v5e: ridge ~240 flop/B -> 512x512 already compute-bound.
        return 512, 512, 1024, 64 * MiB, False
    if "v6" in kind:
        # v6e: 128 MiB physical VMEM; hardest compute/BW ratio -> big tiles.
        return 1024, 1024, 1024, 100 * MiB, False
    if "v7" in kind or "7x" in kind:
        # v7x: only 64 MiB VMEM per TC, but 2 TCs per chip.
        return 1024, 1024, 1024, 56 * MiB, True
    # Unknown chip: conservative VMEM cap, assume megacore-style sharding OK.
    return 1024, 1024, 1024, 56 * MiB, True


def _pick_tile(dim, cap):
    """Largest power-of-two tile (<= cap) that minimizes padding of `dim`."""
    best_t, best_pad = None, None
    for c in (1024, 512, 256, 128):
        if c > cap:
            continue
        padded = _round_up(dim, c)
        if best_pad is None or padded < best_pad:
            best_t, best_pad = c, padded
    return best_t, best_pad


def _pick_tm(M, cap):
    """M tile: minimal padding, MXU-friendly when cheap, single block if possible."""
    if M <= cap:
        tm = _round_up(M, 16)              # bf16 sublane packing
        tm128 = _round_up(M, 128)          # MXU-friendly shape
        if tm128 <= cap and (tm128 - M) * 8 <= max(M, 1):   # <=12.5% waste
            tm = tm128
        return tm
    nblk = _cdiv(M, cap)                   # minimal number of M blocks
    return _round_up(_cdiv(M, nblk), 128)  # even split, rounded to 128


# ----------------------------------------------------------------------------
# Kernels
# ----------------------------------------------------------------------------
def _mm_acc_bias_kernel(x_ref, w_ref, b_ref, o_ref, acc_ref):
    """Multi-K-step tile with fused bias epilogue (f32 accumulator scratch)."""
    k = pl.program_id(2)

    @pl.when(k == 0)
    def _():
        acc_ref[...] = jnp.zeros_like(acc_ref)

    acc_ref[...] += jnp.dot(
        x_ref[...], w_ref[...], preferred_element_type=jnp.float32
    )

    @pl.when(k == pl.num_programs(2) - 1)
    def _():
        o_ref[...] = (acc_ref[...] + b_ref[...].astype(jnp.float32)).astype(
            o_ref.dtype
        )


def _mm_acc_kernel(x_ref, w_ref, o_ref, acc_ref):
    """Multi-K-step tile, no bias."""
    k = pl.program_id(2)

    @pl.when(k == 0)
    def _():
        acc_ref[...] = jnp.zeros_like(acc_ref)

    acc_ref[...] += jnp.dot(
        x_ref[...], w_ref[...], preferred_element_type=jnp.float32
    )

    @pl.when(k == pl.num_programs(2) - 1)
    def _():
        o_ref[...] = acc_ref[...].astype(o_ref.dtype)


def _mm_bias_kernel(x_ref, w_ref, b_ref, o_ref):
    """Single K step: no accumulator scratch, bias fused."""
    o_ref[...] = (
        jnp.dot(x_ref[...], w_ref[...], preferred_element_type=jnp.float32)
        + b_ref[...].astype(jnp.float32)
    ).astype(o_ref.dtype)


def _mm_kernel(x_ref, w_ref, o_ref):
    """Single K step, no bias."""
    o_ref[...] = jnp.dot(
        x_ref[...], w_ref[...], preferred_element_type=jnp.float32
    ).astype(o_ref.dtype)


# ----------------------------------------------------------------------------
# Jitted forward: reshape + pad + pallas_call + slice in ONE dispatch.
# ----------------------------------------------------------------------------
@functools.partial(
    jax.jit, static_argnames=("n_out", "tm", "tn", "tk", "vmem_limit")
)
def _column_parallel_forward(x, w_t, bias2d, *, n_out, tm, tn, tk, vmem_limit):
    """x: (..., K); w_t: (k_pad, n_pad) pre-transposed weight; bias2d: (1, n_pad) f32 or None."""
    lead = x.shape[:-1]
    K = x.shape[-1]
    k_pad, n_pad = w_t.shape

    x2d = x.reshape(-1, K).astype(w_t.dtype)
    M = x2d.shape[0]
    m_pad = _round_up(M, tm)

    if (m_pad != M) or (k_pad != K):
        x2d = jnp.pad(x2d, ((0, m_pad - M), (0, k_pad - K)))

    grid_m, grid_n, grid_k = m_pad // tm, n_pad // tn, k_pad // tk
    has_bias = bias2d is not None
    single_k = grid_k == 1

    # HBM traffic: x re-read per N block, W re-read per M block, out written once.
    itemsize = jnp.dtype(w_t.dtype).itemsize
    bytes_accessed = (
        grid_n * m_pad * k_pad + grid_m * k_pad * n_pad + m_pad * n_pad
    ) * itemsize
    if has_bias:
        bytes_accessed += grid_m * n_pad * 4
    cost = pl.CostEstimate(
        flops=2 * m_pad * n_pad * k_pad,
        transcendentals=0,
        bytes_accessed=int(bytes_accessed),
    )

    # TODO(synk): for decode-shaped (tiny tm) calls, pipeline_mode=pl.Buffered(3)
    # on the weight BlockSpec could further hide HBM latency jitter.
    if single_k:
        grid = (grid_m, grid_n)
        in_specs = [
            pl.BlockSpec((tm, tk), lambda i, j: (i, 0)),   # x
            pl.BlockSpec((tk, tn), lambda i, j: (0, j)),   # W^T (K, N)
        ]
        if has_bias:
            in_specs.append(pl.BlockSpec((1, tn), lambda i, j: (0, j)))
        out_specs = pl.BlockSpec((tm, tn), lambda i, j: (i, j))
        scratch = []
        semantics = ("parallel", "parallel")
        kernel = _mm_bias_kernel if has_bias else _mm_kernel
    else:
        grid = (grid_m, grid_n, grid_k)
        in_specs = [
            pl.BlockSpec((tm, tk), lambda i, j, k: (i, k)),  # x
            pl.BlockSpec((tk, tn), lambda i, j, k: (k, j)),  # W^T (K, N)
        ]
        if has_bias:
            in_specs.append(pl.BlockSpec((1, tn), lambda i, j, k: (0, j)))
        out_specs = pl.BlockSpec((tm, tn), lambda i, j, k: (i, j))
        scratch = [pltpu.VMEM((tm, tn), jnp.float32)]
        semantics = ("parallel", "parallel", "arbitrary")
        kernel = _mm_acc_bias_kernel if has_bias else _mm_acc_kernel

    args = (x2d, w_t) + ((bias2d,) if has_bias else ())
    y = pl.pallas_call(
        kernel,
        out_shape=jax.ShapeDtypeStruct((m_pad, n_pad), w_t.dtype),
        grid_spec=pltpu.PrefetchScalarGridSpec(
            num_scalar_prefetch=0,
            grid=grid,
            in_specs=in_specs,
            out_specs=out_specs,
            scratch_shapes=scratch,
        ),
        compiler_params=pltpu.CompilerParams(
            dimension_semantics=semantics,
            vmem_limit_bytes=vmem_limit,
        ),
        cost_estimate=cost,
    )(*args)

    if (m_pad != M) or (n_pad != n_out):
        y = y[:M, :n_out]
    return y.reshape(lead + (n_out,))


# ----------------------------------------------------------------------------
# Module
# ----------------------------------------------------------------------------
class ColumnParallelLinear:
    """JAX/Pallas port of the PyTorch ColumnParallelLinear (bf16 F.linear path)."""

    dtype = jnp.bfloat16

    def __init__(self, in_features, out_features, bias=False, dtype=None,
                 world_size=1, key=None):
        assert out_features % world_size == 0, "out_features % world_size != 0"
        self.in_features = in_features
        self.out_features = out_features
        self.part_out_features = out_features // world_size
        wdtype = dtype or ColumnParallelLinear.dtype

        key = jax.random.PRNGKey(0) if key is None else key
        kw, kb = jax.random.split(key)
        N, K = self.part_out_features, in_features
        # Deterministic synthetic init (reference module uses torch.empty).
        w = (jax.random.normal(kw, (N, K), jnp.float32) * 0.02).astype(wdtype)
        # Bias matches torch default dtype (float32), added in f32 in-kernel.
        self.bias = (
            (jax.random.normal(kb, (N,), jnp.float32) * 0.02)
            if bias else None
        )
        # TODO(synk): fp8 (v7x) / int8 (v5e,v6e) quantized-weight path
        # (act_quant / weight_dequant / fp8_gemm) not implemented; only the
        # bf16 F.linear path is exercised.

        # Generation-aware tiling caps & VMEM budget.
        tm_cap, tn_cap, tk_cap, vmem_limit, two_cores = _gen_config()
        self._tm_cap = tm_cap
        self._vmem_limit = vmem_limit
        self._two_cores = two_cores
        self._tn, n_pad = _pick_tile(N, tn_cap)
        self._tk, k_pad = _pick_tile(K, tk_cap)
        self._n_pad, self._k_pad = n_pad, k_pad

        # One-time layout work: transpose to (K, N), pad to tile multiples.
        # The untransposed weight is NOT kept (single HBM copy).
        self._w_t = jnp.pad(w.T, ((0, k_pad - K), (0, n_pad - N)))
        self._bias2d = (
            jnp.pad(self.bias, (0, n_pad - N)).reshape(1, n_pad)
            if bias else None
        )

    @property
    def weight(self):
        """Reconstructed (N, K) weight view (for reference checks only)."""
        return self._w_t[: self.in_features, : self.part_out_features].T

    def __call__(self, x):
        K, N = self.in_features, self.part_out_features
        assert x.shape[-1] == K, (x.shape, K)
        M = 1
        for d in x.shape[:-1]:
            M *= int(d)

        tm = _pick_tm(M, self._tm_cap)
        tn = self._tn
        if self._two_cores:
            # Keep >= 2 blocks on the parallel axes so both v7x TensorCores
            # get work even for decode-shaped (single-M-block) calls.
            m_blocks = _cdiv(M, tm)
            n_blocks = self._n_pad // tn
            if m_blocks * n_blocks < 2:
                if tn >= 256:
                    tn //= 2
                elif tm >= 32:
                    tm = _round_up(_cdiv(M, 2), 16)

        return _column_parallel_forward(
            x, self._w_t, self._bias2d,
            n_out=N, tm=tm, tn=tn, tk=self._tk,
            vmem_limit=self._vmem_limit,
        )


# ----------------------------------------------------------------------------
# Self-test
# ----------------------------------------------------------------------------
if __name__ == "__main__":
    key = jax.random.PRNGKey(0)
    kx1, kx2, kx3, kp1, kp2 = jax.random.split(key, 5)

    # Case 1: aligned shapes, no bias (module default).
    batch, seq, in_features, out_features = 2, 8, 128, 256
    layer1 = ColumnParallelLinear(in_features, out_features, bias=False,
                                  world_size=1, key=kp1)
    x1 = jax.random.normal(kx1, (batch, seq, in_features), jnp.float32).astype(
        jnp.bfloat16)
    y1 = jax.block_until_ready(layer1(x1))
    assert y1.shape == (batch, seq, out_features), y1.shape
    assert y1.dtype == jnp.bfloat16, y1.dtype
    y1_ref = jnp.dot(x1.astype(jnp.float32),
                     layer1.weight.astype(jnp.float32).T)
    err1 = float(jnp.max(jnp.abs(y1.astype(jnp.float32) - y1_ref)))
    assert err1 < 0.1, err1

    # Case 2: ragged shapes (M, K, N not tile multiples) + fused bias.
    layer2 = ColumnParallelLinear(96, 200, bias=True, world_size=1, key=kp2)
    x2 = jax.random.normal(kx2, (3, 5, 96), jnp.float32).astype(jnp.bfloat16)
    y2 = jax.block_until_ready(layer2(x2))
    assert y2.shape == (3, 5, 200), y2.shape
    y2_ref = (
        jnp.dot(x2.astype(jnp.float32), layer2.weight.astype(jnp.float32).T)
        + layer2.bias.astype(jnp.float32)[None, None, :]
    )
    err2 = float(jnp.max(jnp.abs(y2.astype(jnp.float32) - y2_ref)))
    assert err2 < 0.1, err2

    # Case 3: exercise the multi-K-step accumulator path at small shape by
    # forcing tk < K directly through the jitted forward.
    w3 = (jax.random.normal(kp1, (256, 256), jnp.float32) * 0.02).astype(
        jnp.bfloat16)
    x3 = jax.random.normal(kx3, (32, 256), jnp.float32).astype(jnp.bfloat16)
    y3 = jax.block_until_ready(_column_parallel_forward(
        x3, w3.T, None, n_out=256, tm=32, tn=128, tk=128,
        vmem_limit=48 * 1024 * 1024))
    y3_ref = jnp.dot(x3.astype(jnp.float32), w3.astype(jnp.float32).T)
    err3 = float(jnp.max(jnp.abs(y3.astype(jnp.float32) - y3_ref)))
    assert err3 < 0.2, err3

    print("KERNEL_OK")
</pallas_src>

<mosaic_0001>
module attributes {stable_mosaic.version = 11 : i64} {
  func.func @_mm_kernel(%arg0: i32, %arg1: i32, %arg2: memref<16x128xbf16, #tpu.memory_space<vmem>>, %arg3: memref<128x128xbf16, #tpu.memory_space<vmem>>, %arg4: memref<16x128xbf16, #tpu.memory_space<vmem>>) attributes {dimension_semantics = [#tpu.dimension_semantics<parallel>, #tpu.dimension_semantics<parallel>], iteration_bounds = array<i64: 1, 2>, scalar_prefetch = 0 : i64, scratch_operands = 0 : i64, tpu.core_type = #tpu.core_type<tc>, window_params = [{transform_indices = @transform_0, window_bounds = array<i64: 16, 128>}, {transform_indices = @transform_1, window_bounds = array<i64: 128, 128>}, {transform_indices = @transform_2, window_bounds = array<i64: 16, 128>}]} {
    %c0 = arith.constant 0 : index
    %c0_0 = arith.constant 0 : index
    %0 = vector.load %arg2[%c0, %c0_0] : memref<16x128xbf16, #tpu.memory_space<vmem>>, vector<16x128xbf16>
    %c0_1 = arith.constant 0 : index
    %c0_2 = arith.constant 0 : index
    %1 = vector.load %arg3[%c0_1, %c0_2] : memref<128x128xbf16, #tpu.memory_space<vmem>>, vector<128x128xbf16>
    %cst = arith.constant dense<0.000000e+00> : vector<16x128xf32>
    %2 = tpu.matmul %0, %1, %cst {dimension_numbers = #tpu.dot_dimension_numbers<[1], [0], [0], [1], [0, 0, 1, 1], [], []>} : vector<16x128xbf16>, vector<128x128xbf16>, vector<16x128xf32> -> vector<16x128xf32>
    %3 = arith.truncf %2 : vector<16x128xf32> to vector<16x128xbf16>
    %c0_3 = arith.constant 0 : index
    %c0_4 = arith.constant 0 : index
    %4 = vector.load %arg4[%c0_3, %c0_4] : memref<16x128xbf16, #tpu.memory_space<vmem>>, vector<16x128xbf16>
    tpu.vector_store %arg4[%c0_3, %c0_4], %3 {strides = array<i32>} : memref<16x128xbf16, #tpu.memory_space<vmem>>, vector<16x128xbf16>,
    return
  }
  func.func @transform_0(%arg0: i32, %arg1: i32) -> (i32, i32) {
    %c0_i32 = arith.constant 0 : i32
    %c0_i32_0 = arith.constant 0 : i32
    return %arg0, %c0_i32 : i32, i32
  }
  func.func @transform_1(%arg0: i32, %arg1: i32) -> (i32, i32) {
    %c0_i32 = arith.constant 0 : i32
    %c0_i32_0 = arith.constant 0 : i32
    return %c0_i32, %arg1 : i32, i32
  }
  func.func @transform_2(%arg0: i32, %arg1: i32) -> (i32, i32) {
    %c0_i32 = arith.constant 0 : i32
    return %arg0, %arg1 : i32, i32
  }
}

</mosaic_0001>

<llo_original>
// kernel: _column_parallel_forward.1
$region0: #{_column_parallel_forward.1}
  #allocation0 [shape = 'u32[]', space=smem, size = 0x4, offset = 0x4, fixed_abs, tag = 'smem constant byte address 0x4 - core index']
  #allocation1 [shape = 'u32[144,128]{1,0:T(1,128)}', space=vmem, size = 0x12000, scoped, tag = 'internal scratch']
  %s0 = inlined_call_operand.hbm [shape: bf16[16,128], index: 0, kind: input, shape index: {}]
  %s1 = inlined_call_operand.hbm [shape: bf16[128,256], index: 1, kind: input, shape index: {}]
  %s2 = inlined_call_operand.hbm [shape: bf16[16,256], index: 2, kind: output, shape index: {}]
  %s3 = sld [smem:[#allocation0]]
  $region49: #{_column_parallel_forward.1} parent=0
    _
  %s5 = ssub.s32 1, %s3
  %s6 = scalar_select 0, %s5, %s3
  $region1: #{_column_parallel_forward.1} parent=0
    #allocation2 [shape = 'u8[4096]{0}', space=vmem, size = 0x1000, scoped, tag = 'input window, operand 0, single buffered']
    #allocation3 [shape = 's32[2]{0}', space=sflag, size = 0x8, scoped, tag = 'scoped memory for _column_parallel_forward.1']
    #allocation4 [shape = 's32[2]{0}', space=sflag, size = 0x8, scoped, tag = 'scoped memory for _column_parallel_forward.1']
    #allocation5 [shape = 'u8[65536]{0}', space=vmem, size = 0x10000, scoped, tag = 'input window, operand 1']
    #allocation6 [shape = 's32[2]{0}', space=sflag, size = 0x8, scoped, tag = 'scoped memory for _column_parallel_forward.1']
    #allocation7 [shape = 'u8[8192]{0}', space=vmem, size = 0x2000, scoped, tag = 'output window, operand 0']
    %7 = vsyncpa [#allocation3], 0
    %8 = vsyncpa [#allocation6], 0
    %s9 = scalar_lea.sflag [#allocation6], 1
    %10 = vsyncpa %s9, 0
    %11 = vsyncpa [#allocation4], 0
    %s12 = scalar_lea.sflag [#allocation4], 1
    %13 = vsyncpa %s12, 0
    loop: start=0, step=1, limit=4
    $region2: #{_column_parallel_forward.1} parent=1 // loop_pre_header
      _
    $region3: #{_column_parallel_forward.1} parent=1 // loop_header
      %s15 = sphi 0, %s19
      %p16 = scmp.ge.s32.totalorder %s15, 4
      %s22 = sphi 0, %s34
      %s23 = sphi 0, %s30
      %s24 = sphi 0, %s22
      %s25 = sphi 0, %s23
      %s26 = sphi 0, %s24
      %s27 = sphi 0, %s25
      %s37 = sphi 0, %s39
      %s40 = sphi 0, %s37
      %s41 = sphi 0, %s40
      %s57 = sphi 0, %s41
      %s63 = sphi 0, %s65
      %s66 = sphi 0, %s63
      %s67 = sphi 0, %s66
      %s83 = sphi 0, %s67
      %s91 = sphi 0, %s93
      %s94 = sphi 0, %s91
      %s95 = sphi 0, %s94
      %s111 = sphi 0, %s95
    $region4: #{_column_parallel_forward.1} parent=1 // loop_header_branch
      %18 = sbr.rel (%p16) target = $region8
    $region5: #{_column_parallel_forward.1} parent=1 // loop_body
      %s20 = ssub.s32 %s15, 1
      %s21 = ssub.s32 %s15, 2
      %s28 = sadd.s32 1, %s23
      %p29 = scmp.ge.s32.totalorder %s28, 2
      %s30 = scalar_select %p29, 0, %s28
      %s31 = sadd.s32 1, %s22
      %s32 = scalar_select %p29, %s31, %s22
      %p33 = scmp.ge.s32.totalorder %s32, 1
      %s34 = scalar_select %p33, 0, %s32
      %s35 = ssub.s32 %s22, %s34
      %p36 = scmp.eq.s32.totalorder %s35, 0
      %s38 = sadd.s32 %s37, 1
      %s39 = scalar_select %p36, %s37, %s38
      %p42 = pneg %p36
      %p43 = scmp.eq.s32.totalorder %s15, 1
      %p44 = por %p42, %p43
      %p45 = scmp.ne.s32.totalorder %s37, %s40
      %p46 = scmp.eq.s32.totalorder %s15, 0
      %p47 = por %p45, %p46
      %p48 = scmp.ne.s32.totalorder %s37, %s40
      %p49 = scmp.eq.s32.totalorder %s20, 1
      %p50 = por %p48, %p49
      %p51 = scmp.ne.s32.totalorder %s40, %s41
      %p52 = scmp.eq.s32.totalorder %s20, 0
      %p53 = por %p51, %p52
      %p54 = scmp.ne.s32.totalorder %s40, %s41
      %p55 = scmp.eq.s32.totalorder %s21, 1
      %p56 = por %p54, %p55
      %p58 = scmp.ne.s32.totalorder %s41, %s57
      %p59 = scmp.eq.s32.totalorder %s21, 0
      %p60 = por %p58, %p59
      %s61 = ssub.s32 %s23, %s30
      %p62 = scmp.eq.s32.totalorder %s61, 0
      %s64 = sadd.s32 %s63, 1
      %s65 = scalar_select %p62, %s63, %s64
      %p68 = pneg %p62
      %p69 = scmp.eq.s32.totalorder %s15, 1
      %p70 = por %p68, %p69
      %p71 = scmp.ne.s32.totalorder %s63, %s66
      %p72 = scmp.eq.s32.totalorder %s15, 0
      %p73 = por %p71, %p72
      %p74 = scmp.ne.s32.totalorder %s63, %s66
      %p75 = scmp.eq.s32.totalorder %s20, 1
      %p76 = por %p74, %p75
      %p77 = scmp.ne.s32.totalorder %s66, %s67
      %p78 = scmp.eq.s32.totalorder %s20, 0
      %p79 = por %p77, %p78
      %p80 = scmp.ne.s32.totalorder %s66, %s67
      %p81 = scmp.eq.s32.totalorder %s21, 1
      %p82 = por %p80, %p81
      %p84 = scmp.ne.s32.totalorder %s67, %s83
      %p85 = scmp.eq.s32.totalorder %s21, 0
      %p86 = por %p84, %p85
      %s87 = ssub.s32 %s22, %s34
      %s88 = ssub.s32 %s23, %s30
      %s89 = sor.u32 %s87, %s88
      %p90 = scmp.eq.s32.totalorder %s89, 0
      %s92 = sadd.s32 %s91, 1
      %s93 = scalar_select %p90, %s91, %s92
      %p96 = pneg %p90
      %p97 = scmp.eq.s32.totalorder %s15, 1
      %p98 = por %p96, %p97
      %p99 = scmp.ne.s32.totalorder %s91, %s94
      %p100 = scmp.eq.s32.totalorder %s15, 0
      %p101 = por %p99, %p100
      %p102 = scmp.ne.s32.totalorder %s91, %s94
      %p103 = scmp.eq.s32.totalorder %s20, 1
      %p104 = por %p102, %p103
      %p105 = scmp.ne.s32.totalorder %s94, %s95
      %p106 = scmp.eq.s32.totalorder %s20, 0
      %p107 = por %p105, %p106
      %p108 = scmp.ne.s32.totalorder %s94, %s95
      %p109 = scmp.eq.s32.totalorder %s21, 1
      %p110 = por %p108, %p109
      %p112 = scmp.ne.s32.totalorder %s95, %s111
      %p113 = scmp.eq.s32.totalorder %s21, 0
      %p114 = por %p112, %p113
      %p115 = scmp.le.s32.totalorder 1, %s15
      %p116 = scmp.lt.s32.totalorder %s15, 3
      %p117 = pnand %p115, %p116
      %p118 = pneg %p117
      // Predicated region
      $region9: #{_column_parallel_forward.1} parent=5 // pred_check
        _
      $region10: #{_column_parallel_forward.1} parent=5 // pred_check_branch
        %120 = sbr.rel (%p117) target = $region12
      $region11: #{_column_parallel_forward.1} parent=5 // pred_region
        %s121 = ssub.s32 %s15, 1
        // Predicated region
        $region13: #{_column_parallel_forward.1} parent=11 // pred_check
          %p122 = pneg %p53
        $region14: #{_column_parallel_forward.1} parent=11 // pred_check_branch
          %124 = sbr.rel (%p122) target = $region16
        $region15: #{_column_parallel_forward.1} parent=11 // pred_region
          %s125 = smul.u32 2, %s24
          %s127 = ssub.s32 128, 128
          %128 = vsyncadd [#allocation3], %s127
          %s129 = smul.addr %s125, 64
          %s130 = scalar_lea.hbm %s0, %s129
          %s131 = sshll.u32 [#allocation2], 4
          %s132 = int_to_ptr.vmem [resolvable:$true] %s131
          %137 = dma.hbm_to_vmem [thread:$0]  %s130, 128, %s132, [#allocation3], 64, 64, 4
        $region16: #{_column_parallel_forward.1} parent=11 // pred_fallthru
          _
      $region12: #{_column_parallel_forward.1} parent=5 // pred_fallthru
        _
      %p138 = scmp.lt.s32.totalorder %s15, 2
      // Predicated region
      $region17: #{_column_parallel_forward.1} parent=5 // pred_check
        %p139 = pneg %p138
      $region18: #{_column_parallel_forward.1} parent=5 // pred_check_branch
        %141 = sbr.rel (%p139) target = $region20
      $region19: #{_column_parallel_forward.1} parent=5 // pred_region
        // Predicated region
        $region21: #{_column_parallel_forward.1} parent=19 // pred_check
          %p142 = pneg %p73
        $region22: #{_column_parallel_forward.1} parent=19 // pred_check_branch
          %144 = sbr.rel (%p142) target = $region24
        $region23: #{_column_parallel_forward.1} parent=19 // pred_region
          %s145 = sand.u32 %s63, 1
          %s146 = scalar_lea.sflag [#allocation6], %s145
          %s147 = sand.u32 %s63, 1
          %s148 = smul.addr %s147, 64
          %s149 = scalar_lea.vmem [#allocation5], %s148
          %s151 = ssub.s32 1024, 1024
          %152 = vsyncadd %s146, %s151
          %s153 = smul.addr %s23, 64
          %s154 = scalar_lea.hbm %s1, %s153
          %s155 = sshll.u32 %s149, 4
          %s156 = int_to_ptr.vmem [resolvable:$true] %s155
          %161 = dma.hbm_to_vmem [thread:$0]  %s154, 1024, %s156, %s146, 128, 64, 4
        $region24: #{_column_parallel_forward.1} parent=19 // pred_fallthru
          _
      $region20: #{_column_parallel_forward.1} parent=5 // pred_fallthru
        _
      %p162 = scmp.le.s32.totalorder 1, %s15
      %p163 = scmp.lt.s32.totalorder %s15, 3
      %p164 = pnand %p162, %p163
      %p165 = pneg %p164
      // Predicated region
      $region25: #{_column_parallel_forward.1} parent=5 // pred_check
        _
      $region26: #{_column_parallel_forward.1} parent=5 // pred_check_branch
        %167 = sbr.rel (%p164) target = $region28
      $region27: #{_column_parallel_forward.1} parent=5 // pred_region
        %s168 = ssub.s32 %s15, 1
        // Predicated region
        $region29: #{_column_parallel_forward.1} parent=27 // pred_check
          %p169 = pneg %p53
        $region30: #{_column_parallel_forward.1} parent=27 // pred_check_branch
          %171 = sbr.rel (%p169) target = $region32
        $region31: #{_column_parallel_forward.1} parent=27 // pred_region
          %172 = dma.done [#allocation3], 128
        $region32: #{_column_parallel_forward.1} parent=27 // pred_fallthru
          _
        %s173 = sand.u32 %s66, 1
        %s174 = scalar_lea.sflag [#allocation6], %s173
        %s175 = sand.u32 %s66, 1
        %s176 = smul.addr %s175, 64
        %s177 = scalar_lea.vmem [#allocation5], %s176
        // Predicated region
        $region33: #{_column_parallel_forward.1} parent=27 // pred_check
          %p178 = pneg %p79
        $region34: #{_column_parallel_forward.1} parent=27 // pred_check_branch
          %180 = sbr.rel (%p178) target = $region36
        $region35: #{_column_parallel_forward.1} parent=27 // pred_region
          %181 = dma.done %s174, 1024
        $region36: #{_column_parallel_forward.1} parent=27 // pred_fallthru
          _
        %p182 = pneg %p53
        %p183 = pneg %p50
        %s184 = sand.u32 %s66, 1
        %s185 = scalar_lea.sflag [#allocation6], %s184
        %s186 = sand.u32 %s66, 1
        %s187 = smul.addr %s186, 64
        %s188 = scalar_lea.vmem [#allocation5], %s187
        %p189 = pneg %p79
        %p190 = pneg %p76
        %p191 = pneg %p107
        %p192 = pneg %p104
        %s193 = sand.u32 %s94, 1
        %s194 = scalar_lea.sflag [#allocation4], %s193
        %s195 = sand.u32 %s94, 1
        %s196 = smul.addr %s195, 8
        %s197 = scalar_lea.vmem [#allocation7], %s196
        %s198 = smul.u32 2, %s24
        %s199 = smul.u32 2, %s24
        %v201 = vld [vmem:[#allocation2] sm:$0xf]
        %v202 = vld [vmem:[#allocation2 + $0x4] sm:$0xf]
        %v203 = vld [vmem:[%s177] sm:$0xf]
        %v204 = vld [vmem:[%s177 + $0x4] sm:$0xf]
        %v205 = vld [vmem:[%s177 + $0x8] sm:$0xf]
        %v206 = vld [vmem:[%s177 + $0xc] sm:$0xf]
        %v207 = vld [vmem:[%s177 + $0x10] sm:$0xf]
        %v208 = vld [vmem:[%s177 + $0x14] sm:$0xf]
        %v209 = vld [vmem:[%s177 + $0x18] sm:$0xf]
        %v210 = vld [vmem:[%s177 + $0x1c] sm:$0xf]
        %v211 = vld [vmem:[%s177 + $0x20] sm:$0xf]
        %v212 = vld [vmem:[%s177 + $0x24] sm:$0xf]
        %v213 = vld [vmem:[%s177 + $0x28] sm:$0xf]
        %v214 = vld [vmem:[%s177 + $0x2c] sm:$0xf]
        %v215 = vld [vmem:[%s177 + $0x30] sm:$0xf]
        %v216 = vld [vmem:[%s177 + $0x34] sm:$0xf]
        %v217 = vld [vmem:[%s177 + $0x38] sm:$0xf]
        %v218 = vld [vmem:[%s177 + $0x3c] sm:$0xf]
        %v221 = vunpack.c.l.b16 %v201
        %v222 = vunpack.c.l.b16 %v202
        %v223 = vpack.c.b16 %v222, %v221
        %v241 = vunpack.c.l.b16 %v203
        %v242 = vunpack.c.l.b16 %v204
        %v243 = vunpack.c.l.b16 %v205
        %v244 = vunpack.c.l.b16 %v206
        %v245 = vunpack.c.l.b16 %v207
        %v246 = vunpack.c.l.b16 %v208
        %v247 = vunpack.c.l.b16 %v209
        %v248 = vunpack.c.l.b16 %v210
        %v249 = vunpack.c.l.b16 %v211
        %v250 = vunpack.c.l.b16 %v212
        %v251 = vunpack.c.l.b16 %v213
        %v252 = vunpack.c.l.b16 %v214
        %v253 = vunpack.c.l.b16 %v215
        %v254 = vunpack.c.l.b16 %v216
        %v255 = vunpack.c.l.b16 %v217
        %v256 = vunpack.c.l.b16 %v218
        %v257 = vpack.c.b16 %v242, %v241
        %v258 = vpack.c.b16 %v244, %v243
        %v259 = vpack.c.b16 %v246, %v245
        %v260 = vpack.c.b16 %v248, %v247
        %v261 = vpack.c.b16 %v250, %v249
        %v262 = vpack.c.b16 %v252, %v251
        %v263 = vpack.c.b16 %v254, %v253
        %v264 = vpack.c.b16 %v256, %v255
        %273 = vmatprep.subr.bf16.mxu0 0
        %274 = vmatpush1.bf16.msra.mxu0 %v264
        %275 = vmatprep.subr.bf16.mxu0 0
        %276 = vmatpush1.bf16.msra.mxu0 %v263
        %277 = vmatprep.subr.bf16.mxu0 0
        %278 = vmatpush1.bf16.msra.mxu0 %v262
        %279 = vmatprep.subr.bf16.mxu0 0
        %280 = vmatpush1.bf16.msra.mxu0 %v261
        %281 = vmatprep.subr.bf16.mxu0 0
        %282 = vmatpush1.bf16.msra.mxu0 %v260
        %283 = vmatprep.subr.bf16.mxu0 0
        %284 = vmatpush1.bf16.msra.mxu0 %v259
        %285 = vmatprep.subr.bf16.mxu0 0
        %286 = vmatpush1.bf16.msra.mxu0 %v258
        %287 = vmatprep.subr.bf16.mxu0 0
        %288 = vmatpush1.bf16.msra.mxu0 %v257
        %289 = vmatprep.subr.bf16.mxu0 0
        %290 = vmatpush2.bf16.msra.mxu0 0
        %291 = vmatprep.subr.bf16.mxu0 0
        %292 = vmatpush2.bf16.msra.mxu0 0
        %293 = vmatprep.subr.bf16.mxu0 0
        %294 = vmatpush2.bf16.msra.mxu0 0
        %295 = vmatprep.subr.bf16.mxu0 0
        %296 = vmatpush2.bf16.msra.mxu0 0
        %297 = vmatprep.subr.bf16.mxu0 0
        %298 = vmatpush2.bf16.msra.mxu0 0
        %299 = vmatprep.subr.bf16.mxu0 0
        %300 = vmatpush2.bf16.msra.mxu0 0
        %301 = vmatprep.subr.bf16.mxu0 0
        %302 = vmatpush2.bf16.msra.mxu0 0
        %303 = vmatprep.subr.bf16.mxu0 0
        %304 = vmatpush2.bf16.msra.mxu0 0
        %305 = vmatprep.mubr.bf16.mxu0 0
        %306 = vmatmul.mubr.bf16.gmra.mxu0 %v223
        %v307 = vpop.f32.mrf.mxu0
        %v308 = vadd.f32 0.0, %v307
        %v309 = vpop.f32.mrf.mxu0
        %v310 = vpop.f32.mrf.mxu0
        %v311 = vadd.f32 0.0, %v310
        %v312 = vpop.f32.mrf.mxu0
        %313 = vdwg.mxu0
        %v314 = vpack.c.bf16 %v311, %v308
        %v316 = vunpack.c.l.b16 %v314
        %v317 = vunpack.c.h.b16 %v314
        %v318 = vpack.c.b16 %v316, %v316
        %v319 = vpack.c.b16 %v317, %v317
        %322 = vst [vmem:[%s197] sm:$0xf] %v318
        %323 = vst [vmem:[%s197 + $0x4] sm:$0xf] %v319
        %s324 = sand.u32 %s94, 1
        %s325 = scalar_lea.sflag [#allocation4], %s324
        %s326 = sand.u32 %s94, 1
        %s327 = smul.addr %s326, 8
        %s328 = scalar_lea.vmem [#allocation7], %s327
        // Predicated region
        $region37: #{_column_parallel_forward.1} parent=27 // pred_check
          %p329 = pneg %p104
        $region38: #{_column_parallel_forward.1} parent=27 // pred_check_branch
          %331 = sbr.rel (%p329) target = $region40
        $region39: #{_column_parallel_forward.1} parent=27 // pred_region
          %s332 = smul.u32 2, %s24
          %s334 = ssub.s32 128, 128
          %335 = vsyncadd %s325, %s334
          %s336 = smul.addr %s332, 2
          %s337 = sadd.s32 %s25, %s336
          %s338 = smul.addr %s337, 64
          %s339 = scalar_lea.hbm %s2, %s338
          %s340 = sshll.u32 %s328, 4
          %s341 = int_to_ptr.vmem [resolvable:$true] %s340
          %346 = dma.vmem_to_hbm [thread:$0]  %s341, 128, %s339, %s325, 64, 128, 4
        $region40: #{_column_parallel_forward.1} parent=27 // pred_fallthru
          _
      $region28: #{_column_parallel_forward.1} parent=5 // pred_fallthru
        _
      %p347 = scmp.le.s32.totalorder 2, %s15
      // Predicated region
      $region41: #{_column_parallel_forward.1} parent=5 // pred_check
        %p348 = pneg %p347
      $region42: #{_column_parallel_forward.1} parent=5 // pred_check_branch
        %350 = sbr.rel (%p348) target = $region44
      $region43: #{_column_parallel_forward.1} parent=5 // pred_region
        %s351 = ssub.s32 %s15, 2
        // Predicated region
        $region45: #{_column_parallel_forward.1} parent=43 // pred_check
          %p352 = pneg %p110
        $region46: #{_column_parallel_forward.1} parent=43 // pred_check_branch
          %354 = sbr.rel (%p352) target = $region48
        $region47: #{_column_parallel_forward.1} parent=43 // pred_region
          %s355 = sand.u32 %s95, 1
          %s356 = scalar_lea.sflag [#allocation4], %s355
          %s357 = sand.u32 %s95, 1
          %s358 = smul.addr %s357, 8
          %s359 = scalar_lea.vmem [#allocation7], %s358
          %360 = dma.done %s356, 128
        $region48: #{_column_parallel_forward.1} parent=43 // pred_fallthru
          _
      $region44: #{_column_parallel_forward.1} parent=5 // pred_fallthru
        _
    $region6: #{_column_parallel_forward.1} parent=1 // loop_footer
      %s19 = sadd.s32 1, %s15
    $region7: #{_column_parallel_forward.1} parent=1 // loop_footer_branch
      %14 = sbr.rel target = $region3
    $region8: #{_column_parallel_forward.1} parent=1 // loop_exit
      _
    %361 = vsyncpa [#allocation3], 1
    %s362 = scalar_lea.sflag [#allocation3], 1
    %363 = vsyncpa %s362, 1
    %364 = vsyncpa [#allocation6], 1
    %s365 = scalar_lea.sflag [#allocation6], 1
    %366 = vsyncpa %s365, 1
    %367 = vsyncpa [#allocation4], 1
    %s368 = scalar_lea.sflag [#allocation4], 1
    %369 = vsyncpa %s368, 1

</llo_original>
